<compile_context>
chip_gen: v7x
topology: tpu7x:2x2x1
jax: 0.10.0
libtpu: 0.0.40
codegen_flags: <defaults>
</compile_context>

<pallas_src>
import functools

import jax
import jax.numpy as jnp
from jax import lax
from jax.experimental import pallas as pl
from jax.experimental.pallas import tpu as pltpu

LANES = 128
SUBLANES = 8
_MAX_BLOCK_ROWS = 4096          # (4096,128) f32 tile = 2 MiB per input, per buffer
_STRIP_ROWS = 512               # in-kernel strip size: bounds VMEM temporaries
_NUM_CORE_SPLITS = 2            # 'parallel' axis -> both TCs on v7x; cheap elsewhere
_VMEM_LIMIT_BYTES = 40 * 1024 * 1024   # under v7x's 64 MiB physical, >> actual need


def _ipow(x, g):
    """Keep integer powers on the VPU (multiplies), never EUP pow()."""
    if isinstance(g, int):
        return lax.integer_pow(x, g)
    return x ** g                      # non-integer gamma fallback


def _strip_terms(pred, gt, gamma):
    """(r,128) strip -> folded (8,128) partials for (loss, num_pos)."""
    pred = pred.astype(jnp.float32)
    gt = gt.astype(jnp.float32)

    pos_m = gt == 1.0
    neg_m = gt < 1.0

    # where-select (not multiply-by-mask) so a -inf log on the excluded side
    # (e.g. log(0) for padded pred==0) can never poison the sums.
    pos_t = jnp.where(pos_m, jnp.log(pred) * _ipow(1.0 - pred, gamma), 0.0)
    neg_t = jnp.where(
        neg_m, jnp.log1p(-pred) * _ipow(pred, gamma) * _ipow(1.0 - gt, 4), 0.0)

    loss_t = pos_t + neg_t
    npos_t = pos_m.astype(jnp.float32)

    r = loss_t.shape[0]
    # (r,128) -> (8,128): tile-aligned reshape + leading-axis sum is a chain of
    # vreg adds on the VPU; no XLU cross-lane reduce in the loop.
    fold = lambda x: x.reshape(r // SUBLANES, SUBLANES, LANES).sum(axis=0)
    return fold(loss_t), fold(npos_t)


def _accumulate(pred_ref, gt_ref, loss_ref, npos_ref, *, span_rows, strip_rows,
                gamma):
    """Process the first `span_rows` rows of the tile in strips, fold into refs."""
    n_full = span_rows // strip_rows
    tail = span_rows - n_full * strip_rows

    l_acc = jnp.zeros((SUBLANES, LANES), jnp.float32)
    n_acc = jnp.zeros((SUBLANES, LANES), jnp.float32)

    if n_full > 0:
        def body(s, carry):
            l_c, n_c = carry
            start = pl.multiple_of(s * strip_rows, strip_rows)
            l_s, n_s = _strip_terms(pred_ref[pl.ds(start, strip_rows), :],
                                    gt_ref[pl.ds(start, strip_rows), :], gamma)
            return l_c + l_s, n_c + n_s
        l_acc, n_acc = lax.fori_loop(0, n_full, body, (l_acc, n_acc))

    if tail > 0:
        off = n_full * strip_rows            # static offset, static size
        l_s, n_s = _strip_terms(pred_ref[pl.ds(off, tail), :],
                                gt_ref[pl.ds(off, tail), :], gamma)
        l_acc = l_acc + l_s
        n_acc = n_acc + n_s

    loss_ref[0] += l_acc
    npos_ref[0] += n_acc


def _focal_kernel(pred_ref, gt_ref, loss_ref, npos_ref, *, gamma, block_rows,
                  strip_rows, full_blocks, partial_rows, blocks_per_core):
    c = pl.program_id(0)               # core-split axis ('parallel')
    i = pl.program_id(1)               # row-block walk   ('arbitrary')

    @pl.when(i == 0)
    def _init():
        loss_ref[...] = jnp.zeros_like(loss_ref)
        npos_ref[...] = jnp.zeros_like(npos_ref)

    # Logical (unclamped) block index.  The index_map clamps out-of-range block
    # indices so the DMA stays in bounds; duplicated blocks are simply skipped
    # here with a scalar guard (no per-element masking anywhere).
    blk = c * blocks_per_core + i

    @pl.when(blk < full_blocks)
    def _full():
        _accumulate(pred_ref, gt_ref, loss_ref, npos_ref,
                    span_rows=block_rows, strip_rows=strip_rows, gamma=gamma)

    if partial_rows > 0:               # static: emitted only if a ragged block exists
        @pl.when(blk == full_blocks)
        def _partial():
            # Only the first `partial_rows` rows of this tile are real data;
            # the rest of the VMEM buffer is never read.
            _accumulate(pred_ref, gt_ref, loss_ref, npos_ref,
                        span_rows=partial_rows, strip_rows=strip_rows,
                        gamma=gamma)


def focal_loss_pallas(pred, target, gamma=2, *, max_block_rows=_MAX_BLOCK_ROWS):
    """pred, target: same shape (e.g. NCHW heatmaps). Returns scalar f32 loss."""
    assert pred.shape == target.shape
    if isinstance(gamma, float) and float(gamma).is_integer():
        gamma = int(gamma)

    n = pred.size
    p = pred.reshape(-1)
    t = target.reshape(-1)

    # Row alignment: keep row counts aligned to the packed sublane tile of the
    # narrowest input dtype (8 rows for f32, 16 for bf16, 32 for int8) so every
    # in-kernel strip slice is sublane-aligned.
    itemsize = min(pred.dtype.itemsize, target.dtype.itemsize)
    row_mult = SUBLANES * max(1, 4 // itemsize)

    # Pad only when numel isn't already a multiple of row_mult*128 (typical
    # heatmap sizes are, so usually zero extra HBM traffic).  Zero padding
    # contributes exactly 0 to every term (gt=0 -> not a positive;
    # pred=0 -> pred^gamma * log1p(-pred) == 0), so no masking is needed.
    pad = (-n) % (row_mult * LANES)
    if pad:
        p = jnp.pad(p, (0, pad))
        t = jnp.pad(t, (0, pad))
    rows = (n + pad) // LANES
    p = p.reshape(rows, LANES)
    t = t.reshape(rows, LANES)

    block_rows = min(max_block_rows, rows)
    block_rows = max(row_mult, (block_rows // row_mult) * row_mult)
    total_blocks = pl.cdiv(rows, block_rows)
    full_blocks = rows // block_rows                  # blocks fully in-bounds
    partial_rows = rows - full_blocks * block_rows    # rows in the ragged block (static)
    strip_rows = min(_STRIP_ROWS, block_rows)

    ncs = _NUM_CORE_SPLITS
    blocks_per_core = pl.cdiv(total_blocks, ncs)
    grid = (ncs, blocks_per_core)

    def in_map(c, i):
        # Clamp so duplicate / out-of-range grid steps never DMA past the
        # array; those steps are skipped inside the kernel via scalar pl.when.
        return (jnp.minimum(c * blocks_per_core + i, total_blocks - 1), 0)

    tile_spec = pl.BlockSpec((block_rows, LANES), in_map)
    acc_spec = pl.BlockSpec((1, SUBLANES, LANES), lambda c, i: (c, 0, 0))
    acc_shape = jax.ShapeDtypeStruct((ncs, SUBLANES, LANES), jnp.float32)

    kernel = functools.partial(
        _focal_kernel, gamma=gamma, block_rows=block_rows,
        strip_rows=strip_rows, full_blocks=full_blocks,
        partial_rows=partial_rows, blocks_per_core=blocks_per_core)

    loss_p, npos_p = pl.pallas_call(
        kernel,
        out_shape=(acc_shape, acc_shape),
        grid=grid,
        in_specs=[tile_spec, tile_spec],
        out_specs=(acc_spec, acc_spec),
        compiler_params=pltpu.CompilerParams(
            dimension_semantics=("parallel", "arbitrary"),
            vmem_limit_bytes=_VMEM_LIMIT_BYTES),
    )(p, t)

    # Single epilogue reduce of the small (2,8,128) partials.
    loss_sum = jnp.sum(loss_p)      # = pos_loss + neg_loss
    num_pos = jnp.sum(npos_p)
    # pos_loss == 0 whenever num_pos == 0, so -loss_sum == -neg_loss there.
    return jnp.where(num_pos == 0.0, -loss_sum,
                     -loss_sum / jnp.maximum(num_pos, 1.0))


def focal_loss_ref(pred, gt, gamma=2):
    """Pure-JAX reference (mirrors the PyTorch focal_loss)."""
    pred = pred.astype(jnp.float32)
    gt = gt.astype(jnp.float32)
    pos_inds = (gt == 1.0).astype(jnp.float32)
    neg_inds = (gt < 1.0).astype(jnp.float32)
    neg_weights = (1.0 - gt) ** 4
    pos_loss = jnp.sum(jnp.log(pred) * (1.0 - pred) ** gamma * pos_inds)
    neg_loss = jnp.sum(jnp.log(1.0 - pred) * pred ** gamma * neg_weights * neg_inds)
    num_pos = jnp.sum(pos_inds)
    return jnp.where(num_pos == 0.0, -neg_loss,
                     -(pos_loss + neg_loss) / jnp.maximum(num_pos, 1.0))


class FocalLoss:
    """JAX/Pallas counterpart of the PyTorch FocalLoss module."""

    def __init__(self, gamma=2, ignore=-1):
        self.gamma = gamma
        self.ignore = ignore   # stored but unused in forward (matches PyTorch)

    def __call__(self, input, target):
        return focal_loss_pallas(input, target, self.gamma)


if __name__ == "__main__":
    key = jax.random.PRNGKey(0)
    k1, k2, k3, k4, k5, k6 = jax.random.split(key, 6)

    # --- main check: NCHW heatmaps with a few exact 1.0 peaks -----------------
    B, C, H, W = 2, 4, 16, 16
    pred = jax.nn.sigmoid(jax.random.normal(k1, (B, C, H, W), jnp.float32))
    gt = jax.random.uniform(k2, (B, C, H, W), jnp.float32, 0.0, 0.999)
    peak_b = jax.random.randint(k3, (6,), 0, B)
    peak_c = jax.random.randint(k4, (6,), 0, C)
    peak_h = jax.random.randint(k5, (6,), 0, H)
    peak_w = jax.random.randint(k6, (6,), 0, W)
    gt = gt.at[peak_b, peak_c, peak_h, peak_w].set(1.0)

    loss_fn = FocalLoss(gamma=2, ignore=-1)
    out = jax.block_until_ready(loss_fn(pred, gt))
    ref = focal_loss_ref(pred, gt, gamma=2)
    assert jnp.allclose(out, ref, rtol=1e-4, atol=1e-5), (out, ref)

    # --- ragged / partial-block path + num_pos==0 branch (tiny block cap) -----
    pred2 = jax.nn.sigmoid(jax.random.normal(k3, (3, 5, 9, 17), jnp.float32))
    gt2 = jax.random.uniform(k4, (3, 5, 9, 17), jnp.float32, 0.0, 0.999)
    out2 = jax.block_until_ready(
        focal_loss_pallas(pred2, gt2, gamma=2, max_block_rows=16))
    ref2 = focal_loss_ref(pred2, gt2, gamma=2)
    assert jnp.allclose(out2, ref2, rtol=1e-4, atol=1e-5), (out2, ref2)

    # --- clamped-duplicate-block skip path (total_blocks odd vs 2 core splits)
    pred3 = jax.nn.sigmoid(jax.random.normal(k5, (3, 5, 20, 20), jnp.float32))
    gt3 = jax.random.uniform(k6, (3, 5, 20, 20), jnp.float32, 0.0, 0.999)
    gt3 = gt3.at[0, 0, 0, 0].set(1.0)
    out3 = jax.block_until_ready(
        focal_loss_pallas(pred3, gt3, gamma=2, max_block_rows=16))
    ref3 = focal_loss_ref(pred3, gt3, gamma=2)
    assert jnp.allclose(out3, ref3, rtol=1e-4, atol=1e-5), (out3, ref3)

    print("KERNEL_OK")
</pallas_src>

<mosaic_0001>
module attributes {stable_mosaic.version = 11 : i64} {
  func.func @_focal_kernel(%arg0: i32, %arg1: i32, %arg2: memref<16x128xf32, #tpu.memory_space<vmem>>, %arg3: memref<16x128xf32, #tpu.memory_space<vmem>>, %arg4: memref<1x8x128xf32, #tpu.memory_space<vmem>>, %arg5: memref<1x8x128xf32, #tpu.memory_space<vmem>>) attributes {dimension_semantics = [#tpu.dimension_semantics<parallel>, #tpu.dimension_semantics<arbitrary>], iteration_bounds = array<i64: 2, 1>, scalar_prefetch = 0 : i64, scratch_operands = 0 : i64, tpu.core_type = #tpu.core_type<tc>, window_params = [{transform_indices = @transform_0, window_bounds = array<i64: 16, 128>}, {transform_indices = @transform_1, window_bounds = array<i64: 16, 128>}, {transform_indices = @transform_2, window_bounds = array<i64: 1, 8, 128>}, {transform_indices = @transform_3, window_bounds = array<i64: 1, 8, 128>}]} {
    %c0_i32 = arith.constant 0 : i32
    %0 = arith.cmpi eq, %arg1, %c0_i32 : i32
    %1 = arith.extui %0 : i1 to i32
    %c0_i32_0 = arith.constant 0 : i32
    %2 = arith.cmpi ne, %1, %c0_i32_0 : i32
    scf.if %2 {
      %cst = arith.constant 0.000000e+00 : f32
      %8 = vector.broadcast %cst : f32 to vector<1x8x128xf32>
      %c0 = arith.constant 0 : index
      %c0_3 = arith.constant 0 : index
      %c0_4 = arith.constant 0 : index
      %9 = vector.load %arg4[%c0, %c0_3, %c0_4] : memref<1x8x128xf32, #tpu.memory_space<vmem>>, vector<1x8x128xf32>
      tpu.vector_store %arg4[%c0, %c0_3, %c0_4], %8 {strides = array<i32>} : memref<1x8x128xf32, #tpu.memory_space<vmem>>, vector<1x8x128xf32>,
      %cst_5 = arith.constant 0.000000e+00 : f32
      %10 = vector.broadcast %cst_5 : f32 to vector<1x8x128xf32>
      %c0_6 = arith.constant 0 : index
      %c0_7 = arith.constant 0 : index
      %c0_8 = arith.constant 0 : index
      %11 = vector.load %arg5[%c0_6, %c0_7, %c0_8] : memref<1x8x128xf32, #tpu.memory_space<vmem>>, vector<1x8x128xf32>
      tpu.vector_store %arg5[%c0_6, %c0_7, %c0_8], %10 {strides = array<i32>} : memref<1x8x128xf32, #tpu.memory_space<vmem>>, vector<1x8x128xf32>,
    } else {
    }
    %c1_i32 = arith.constant 1 : i32
    %3 = arith.muli %arg0, %c1_i32 : i32
    %4 = arith.addi %3, %arg1 : i32
    %c1_i32_1 = arith.constant 1 : i32
    %5 = arith.cmpi slt, %4, %c1_i32_1 : i32
    %6 = arith.extui %5 : i1 to i32
    %c0_i32_2 = arith.constant 0 : i32
    %7 = arith.cmpi ne, %6, %c0_i32_2 : i32
    scf.if %7 {
      %cst = arith.constant 0.000000e+00 : f32
      %8 = vector.broadcast %cst : f32 to vector<8x128xf32>
      %cst_3 = arith.constant 0.000000e+00 : f32
      %9 = vector.broadcast %cst_3 : f32 to vector<8x128xf32>
      %c0_i32_4 = arith.constant 0 : i32
      %c16_i32 = arith.constant 16 : i32
      %10 = arith.muli %c0_i32_4, %c16_i32 : i32
      %11 = tpu.assume_multiple %10, 16 : i32
      %12 = arith.index_cast %11 : i32 to index
      %c0 = arith.constant 0 : index
      %13 = vector.load %arg2[%12, %c0] : memref<16x128xf32, #tpu.memory_space<vmem>>, vector<16x128xf32>
      %14 = arith.index_cast %11 : i32 to index
      %c0_5 = arith.constant 0 : index
      %15 = vector.load %arg3[%14, %c0_5] : memref<16x128xf32, #tpu.memory_space<vmem>>, vector<16x128xf32>
      %cst_6 = arith.constant 1.000000e+00 : f32
      %16 = vector.broadcast %cst_6 : f32 to vector<16x128xf32>
      %17 = arith.cmpf oeq, %15, %16 : vector<16x128xf32>
      %cst_7 = arith.constant 1.000000e+00 : f32
      %18 = vector.broadcast %cst_7 : f32 to vector<16x128xf32>
      %19 = arith.cmpf olt, %15, %18 : vector<16x128xf32>
      %20 = math.log %13 : vector<16x128xf32>
      %cst_8 = arith.constant 1.000000e+00 : f32
      %21 = vector.broadcast %cst_8 : f32 to vector<16x128xf32>
      %22 = arith.subf %21, %13 : vector<16x128xf32>
      %23 = arith.mulf %22, %22 : vector<16x128xf32>
      %24 = arith.mulf %20, %23 : vector<16x128xf32>
      %cst_9 = arith.constant 0.000000e+00 : f32
      %25 = vector.broadcast %cst_9 : f32 to vector<16x128xf32>
      %26 = arith.select %17, %24, %25 : vector<16x128xi1>, vector<16x128xf32>
      %cst_10 = arith.constant 0.000000e+00 : f32
      %27 = vector.broadcast %cst_10 : f32 to vector<16x128xf32>
      %28 = arith.subf %27, %13 : vector<16x128xf32>
      %29 = math.log1p %28 : vector<16x128xf32>
      %30 = arith.mulf %13, %13 : vector<16x128xf32>
      %31 = arith.mulf %29, %30 : vector<16x128xf32>
      %cst_11 = arith.constant 1.000000e+00 : f32
      %32 = vector.broadcast %cst_11 : f32 to vector<16x128xf32>
      %33 = arith.subf %32, %15 : vector<16x128xf32>
      %34 = arith.mulf %33, %33 : vector<16x128xf32>
      %35 = arith.mulf %34, %34 : vector<16x128xf32>
      %36 = arith.mulf %31, %35 : vector<16x128xf32>
      %cst_12 = arith.constant 0.000000e+00 : f32
      %37 = vector.broadcast %cst_12 : f32 to vector<16x128xf32>
      %38 = arith.select %19, %36, %37 : vector<16x128xi1>, vector<16x128xf32>
      %39 = arith.addf %26, %38 : vector<16x128xf32>
      %40 = arith.extui %17 : vector<16x128xi1> to vector<16x128xi32>
      %41 = arith.sitofp %40 : vector<16x128xi32> to vector<16x128xf32>
      %42 = vector.shape_cast %39 : vector<16x128xf32> to vector<2x8x128xf32>
      %cst_13 = arith.constant dense<0.000000e+00> : vector<8x128xf32>
      %43 = vector.multi_reduction <add>, %42, %cst_13 [0] : vector<2x8x128xf32> to vector<8x128xf32>
      %44 = vector.shape_cast %41 : vector<16x128xf32> to vector<2x8x128xf32>
      %cst_14 = arith.constant dense<0.000000e+00> : vector<8x128xf32>
      %45 = vector.multi_reduction <add>, %44, %cst_14 [0] : vector<2x8x128xf32> to vector<8x128xf32>
      %46 = arith.addf %8, %43 : vector<8x128xf32>
      %47 = arith.addf %9, %45 : vector<8x128xf32>
      %c1_i32_15 = arith.constant 1 : i32
      %c0_16 = arith.constant 0 : index
      %c0_17 = arith.constant 0 : index
      %c0_18 = arith.constant 0 : index
      %48 = vector.load %arg4[%c0_16, %c0_17, %c0_18] : memref<1x8x128xf32, #tpu.memory_space<vmem>>, vector<1x8x128xf32>
      %49 = vector.shape_cast %48 : vector<1x8x128xf32> to vector<8x128xf32>
      %50 = arith.addf %49, %46 : vector<8x128xf32>
      %c0_19 = arith.constant 0 : index
      %c0_20 = arith.constant 0 : index
      %c0_21 = arith.constant 0 : index
      %51 = vector.load %arg4[%c0_19, %c0_20, %c0_21] : memref<1x8x128xf32, #tpu.memory_space<vmem>>, vector<1x8x128xf32>
      %52 = vector.shape_cast %51 : vector<1x8x128xf32> to vector<8x128xf32>
      %53 = vector.shape_cast %50 : vector<8x128xf32> to vector<1x8x128xf32>
      tpu.vector_store %arg4[%c0_19, %c0_20, %c0_21], %53 {strides = array<i32>} : memref<1x8x128xf32, #tpu.memory_space<vmem>>, vector<1x8x128xf32>,
      %c0_22 = arith.constant 0 : index
      %c0_23 = arith.constant 0 : index
      %c0_24 = arith.constant 0 : index
      %54 = vector.load %arg5[%c0_22, %c0_23, %c0_24] : memref<1x8x128xf32, #tpu.memory_space<vmem>>, vector<1x8x128xf32>
      %55 = vector.shape_cast %54 : vector<1x8x128xf32> to vector<8x128xf32>
      %56 = arith.addf %55, %47 : vector<8x128xf32>
      %c0_25 = arith.constant 0 : index
      %c0_26 = arith.constant 0 : index
      %c0_27 = arith.constant 0 : index
      %57 = vector.load %arg5[%c0_25, %c0_26, %c0_27] : memref<1x8x128xf32, #tpu.memory_space<vmem>>, vector<1x8x128xf32>
      %58 = vector.shape_cast %57 : vector<1x8x128xf32> to vector<8x128xf32>
      %59 = vector.shape_cast %56 : vector<8x128xf32> to vector<1x8x128xf32>
      tpu.vector_store %arg5[%c0_25, %c0_26, %c0_27], %59 {strides = array<i32>} : memref<1x8x128xf32, #tpu.memory_space<vmem>>, vector<1x8x128xf32>,
    } else {
    }
    return
  }
  func.func @transform_0(%arg0: i32, %arg1: i32) -> (i32, i32) {
    %c1_i32 = arith.constant 1 : i32
    %0 = arith.muli %arg0, %c1_i32 : i32
    %1 = arith.addi %0, %arg1 : i32
    %c0_i32 = arith.constant 0 : i32
    %2 = arith.minsi %1, %c0_i32 : i32
    %c0_i32_0 = arith.constant 0 : i32
    %c0_i32_1 = arith.constant 0 : i32
    return %2, %c0_i32_0 : i32, i32
  }
  func.func @transform_1(%arg0: i32, %arg1: i32) -> (i32, i32) {
    %c1_i32 = arith.constant 1 : i32
    %0 = arith.muli %arg0, %c1_i32 : i32
    %1 = arith.addi %0, %arg1 : i32
    %c0_i32 = arith.constant 0 : i32
    %2 = arith.minsi %1, %c0_i32 : i32
    %c0_i32_0 = arith.constant 0 : i32
    %c0_i32_1 = arith.constant 0 : i32
    return %2, %c0_i32_0 : i32, i32
  }
  func.func @transform_2(%arg0: i32, %arg1: i32) -> (i32, i32, i32) {
    %c0_i32 = arith.constant 0 : i32
    %c0_i32_0 = arith.constant 0 : i32
    %c0_i32_1 = arith.constant 0 : i32
    return %arg0, %c0_i32, %c0_i32_0 : i32, i32, i32
  }
  func.func @transform_3(%arg0: i32, %arg1: i32) -> (i32, i32, i32) {
    %c0_i32 = arith.constant 0 : i32
    %c0_i32_0 = arith.constant 0 : i32
    %c0_i32_1 = arith.constant 0 : i32
    return %arg0, %c0_i32, %c0_i32_0 : i32, i32, i32
  }
}

</mosaic_0001>

<llo_original>
// kernel: tpu_custom_call.1
$region0: #{tpu_custom_call.1}
  #allocation0 [shape = 'u32[]', space=smem, size = 0x4, offset = 0x4, fixed_abs, tag = 'smem constant byte address 0x4 - core index']
  #allocation1 [shape = 'u32[144,128]{1,0:T(1,128)}', space=vmem, size = 0x12000, scoped, tag = 'internal scratch']
  %s0 = inlined_call_operand.hbm [shape: f32[16,128], index: 0, kind: input, shape index: {}]
  %s1 = inlined_call_operand.hbm [shape: f32[16,128], index: 1, kind: input, shape index: {}]
  %s2 = inlined_call_operand.hbm [shape: f32[2,8,128], index: 2, kind: output, shape index: {0}]
  %s3 = inlined_call_operand.hbm [shape: f32[2,8,128], index: 3, kind: output, shape index: {1}]
  %4 = xla_tuple %s2, %s3
  %s5 = sld [smem:[#allocation0]]
  $region65: #{tpu_custom_call.1} parent=0
    _
  %s7 = ssub.s32 1, %s5
  %s8 = scalar_select 0, %s7, %s5
  $region1: #{tpu_custom_call.1} parent=0
    #allocation2 [shape = 'u8[16384]{0}', space=vmem, size = 0x4000, scoped, tag = 'input window, operand 0']
    #allocation3 [shape = 's32[2]{0}', space=sflag, size = 0x8, scoped, tag = 'scoped memory for tpu_custom_call.1']
    #allocation4 [shape = 's32[2]{0}', space=sflag, size = 0x8, scoped, tag = 'scoped memory for tpu_custom_call.1']
    #allocation5 [shape = 'u8[16384]{0}', space=vmem, size = 0x4000, scoped, tag = 'input window, operand 1']
    #allocation6 [shape = 's32[2]{0}', space=sflag, size = 0x8, scoped, tag = 'scoped memory for tpu_custom_call.1']
    #allocation7 [shape = 'u8[8192]{0}', space=vmem, size = 0x2000, scoped, tag = 'output window, operand 0']
    #allocation8 [shape = 'u8[8192]{0}', space=vmem, size = 0x2000, scoped, tag = 'output window, operand 1']
    #allocation9 [shape = 's32[2]{0}', space=sflag, size = 0x8, scoped, tag = 'scoped memory for tpu_custom_call.1']
    %9 = vsyncpa [#allocation3], 0
    %s10 = scalar_lea.sflag [#allocation3], 1
    %11 = vsyncpa %s10, 0
    %12 = vsyncpa [#allocation6], 0
    %s13 = scalar_lea.sflag [#allocation6], 1
    %14 = vsyncpa %s13, 0
    %15 = vsyncpa [#allocation4], 0
    %s16 = scalar_lea.sflag [#allocation4], 1
    %17 = vsyncpa %s16, 0
    %18 = vsyncpa [#allocation9], 0
    %s19 = scalar_lea.sflag [#allocation9], 1
    %20 = vsyncpa %s19, 0
    loop: start=0, step=1, limit=4
    $region2: #{tpu_custom_call.1} parent=1 // loop_pre_header
      _
    $region3: #{tpu_custom_call.1} parent=1 // loop_header
      %s22 = sphi 0, %s26
      %p23 = scmp.ge.s32.totalorder %s22, 4
      %s29 = sphi 0, %s41
      %s30 = sphi 0, %s37
      %s31 = sphi 0, %s29
      %s32 = sphi 0, %s30
      %s33 = sphi 0, %s31
      %s34 = sphi 0, %s32
      %s50 = sphi 0, %s52
      %s53 = sphi 0, %s50
      %s54 = sphi 0, %s53
      %s70 = sphi 0, %s54
      %s82 = sphi 0, %s84
      %s85 = sphi 0, %s82
      %s86 = sphi 0, %s85
      %s102 = sphi 0, %s86
      %s108 = sphi 0, %s110
      %s111 = sphi 0, %s108
      %s112 = sphi 0, %s111
      %s128 = sphi 0, %s112
      %s134 = sphi 0, %s136
      %s137 = sphi 0, %s134
      %s138 = sphi 0, %s137
      %s154 = sphi 0, %s138
    $region4: #{tpu_custom_call.1} parent=1 // loop_header_branch
      %25 = sbr.rel (%p23) target = $region8
    $region5: #{tpu_custom_call.1} parent=1 // loop_body
      %s27 = ssub.s32 %s22, 1
      %s28 = ssub.s32 %s22, 2
      %s35 = sadd.s32 1, %s30
      %p36 = scmp.ge.s32.totalorder %s35, 1
      %s37 = scalar_select %p36, 0, %s35
      %s38 = sadd.s32 1, %s29
      %s39 = scalar_select %p36, %s38, %s29
      %p40 = scmp.ge.s32.totalorder %s39, 2
      %s41 = scalar_select %p40, 0, %s39
      %s42 = sadd.s32 %s29, %s30
      %p43 = scmp.lt.s32.totalorder %s42, 0
      %s44 = scalar_select %p43, %s42, 0
      %s45 = sadd.s32 %s41, %s37
      %p46 = scmp.lt.s32.totalorder %s45, 0
      %s47 = scalar_select %p46, %s45, 0
      %s48 = ssub.s32 %s44, %s47
      %p49 = scmp.eq.s32.totalorder %s48, 0
      %s51 = sadd.s32 %s50, 1
      %s52 = scalar_select %p49, %s50, %s51
      %p55 = pneg %p49
      %p56 = scmp.eq.s32.totalorder %s22, 1
      %p57 = por %p55, %p56
      %p58 = scmp.ne.s32.totalorder %s50, %s53
      %p59 = scmp.eq.s32.totalorder %s22, 0
      %p60 = por %p58, %p59
      %p61 = scmp.ne.s32.totalorder %s50, %s53
      %p62 = scmp.eq.s32.totalorder %s27, 1
      %p63 = por %p61, %p62
      %p64 = scmp.ne.s32.totalorder %s53, %s54
      %p65 = scmp.eq.s32.totalorder %s27, 0
      %p66 = por %p64, %p65
      %p67 = scmp.ne.s32.totalorder %s53, %s54
      %p68 = scmp.eq.s32.totalorder %s28, 1
      %p69 = por %p67, %p68
      %p71 = scmp.ne.s32.totalorder %s54, %s70
      %p72 = scmp.eq.s32.totalorder %s28, 0
      %p73 = por %p71, %p72
      %s74 = sadd.s32 %s29, %s30
      %p75 = scmp.lt.s32.totalorder %s74, 0
      %s76 = scalar_select %p75, %s74, 0
      %s77 = sadd.s32 %s41, %s37
      %p78 = scmp.lt.s32.totalorder %s77, 0
      %s79 = scalar_select %p78, %s77, 0
      %s80 = ssub.s32 %s76, %s79
      %p81 = scmp.eq.s32.totalorder %s80, 0
      %s83 = sadd.s32 %s82, 1
      %s84 = scalar_select %p81, %s82, %s83
      %p87 = pneg %p81
      %p88 = scmp.eq.s32.totalorder %s22, 1
      %p89 = por %p87, %p88
      %p90 = scmp.ne.s32.totalorder %s82, %s85
      %p91 = scmp.eq.s32.totalorder %s22, 0
      %p92 = por %p90, %p91
      %p93 = scmp.ne.s32.totalorder %s82, %s85
      %p94 = scmp.eq.s32.totalorder %s27, 1
      %p95 = por %p93, %p94
      %p96 = scmp.ne.s32.totalorder %s85, %s86
      %p97 = scmp.eq.s32.totalorder %s27, 0
      %p98 = por %p96, %p97
      %p99 = scmp.ne.s32.totalorder %s85, %s86
      %p100 = scmp.eq.s32.totalorder %s28, 1
      %p101 = por %p99, %p100
      %p103 = scmp.ne.s32.totalorder %s86, %s102
      %p104 = scmp.eq.s32.totalorder %s28, 0
      %p105 = por %p103, %p104
      %s106 = ssub.s32 %s29, %s41
      %p107 = scmp.eq.s32.totalorder %s106, 0
      %s109 = sadd.s32 %s108, 1
      %s110 = scalar_select %p107, %s108, %s109
      %p113 = pneg %p107
      %p114 = scmp.eq.s32.totalorder %s22, 1
      %p115 = por %p113, %p114
      %p116 = scmp.ne.s32.totalorder %s108, %s111
      %p117 = scmp.eq.s32.totalorder %s22, 0
      %p118 = por %p116, %p117
      %p119 = scmp.ne.s32.totalorder %s108, %s111
      %p120 = scmp.eq.s32.totalorder %s27, 1
      %p121 = por %p119, %p120
      %p122 = scmp.ne.s32.totalorder %s111, %s112
      %p123 = scmp.eq.s32.totalorder %s27, 0
      %p124 = por %p122, %p123
      %p125 = scmp.ne.s32.totalorder %s111, %s112
      %p126 = scmp.eq.s32.totalorder %s28, 1
      %p127 = por %p125, %p126
      %p129 = scmp.ne.s32.totalorder %s112, %s128
      %p130 = scmp.eq.s32.totalorder %s28, 0
      %p131 = por %p129, %p130
      %s132 = ssub.s32 %s29, %s41
      %p133 = scmp.eq.s32.totalorder %s132, 0
      %s135 = sadd.s32 %s134, 1
      %s136 = scalar_select %p133, %s134, %s135
      %p139 = pneg %p133
      %p140 = scmp.eq.s32.totalorder %s22, 1
      %p141 = por %p139, %p140
      %p142 = scmp.ne.s32.totalorder %s134, %s137
      %p143 = scmp.eq.s32.totalorder %s22, 0
      %p144 = por %p142, %p143
      %p145 = scmp.ne.s32.totalorder %s134, %s137
      %p146 = scmp.eq.s32.totalorder %s27, 1
      %p147 = por %p145, %p146
      %p148 = scmp.ne.s32.totalorder %s137, %s138
      %p149 = scmp.eq.s32.totalorder %s27, 0
      %p150 = por %p148, %p149
      %p151 = scmp.ne.s32.totalorder %s137, %s138
      %p152 = scmp.eq.s32.totalorder %s28, 1
      %p153 = por %p151, %p152
      %p155 = scmp.ne.s32.totalorder %s138, %s154
      %p156 = scmp.eq.s32.totalorder %s28, 0
      %p157 = por %p155, %p156
      %p158 = scmp.le.s32.totalorder 1, %s22
      %p159 = scmp.lt.s32.totalorder %s22, 3
      %p160 = pnand %p158, %p159
      %p161 = pneg %p160
      // Predicated region
      $region9: #{tpu_custom_call.1} parent=5 // pred_check
        _
      $region10: #{tpu_custom_call.1} parent=5 // pred_check_branch
        %163 = sbr.rel (%p160) target = $region12
      $region11: #{tpu_custom_call.1} parent=5 // pred_region
        %s164 = ssub.s32 %s22, 1
      $region12: #{tpu_custom_call.1} parent=5 // pred_fallthru
        _
      %p165 = scmp.lt.s32.totalorder %s22, 2
      // Predicated region
      $region13: #{tpu_custom_call.1} parent=5 // pred_check
        %p166 = pneg %p165
      $region14: #{tpu_custom_call.1} parent=5 // pred_check_branch
        %168 = sbr.rel (%p166) target = $region16
      $region15: #{tpu_custom_call.1} parent=5 // pred_region
        // Predicated region
        $region17: #{tpu_custom_call.1} parent=15 // pred_check
          %p169 = pneg %p60
        $region18: #{tpu_custom_call.1} parent=15 // pred_check_branch
          %171 = sbr.rel (%p169) target = $region20
        $region19: #{tpu_custom_call.1} parent=15 // pred_region
          %s172 = sand.u32 %s50, 1
          %s173 = scalar_lea.sflag [#allocation3], %s172
          %s174 = sand.u32 %s50, 1
          %s175 = smul.addr %s174, 16
          %s176 = scalar_lea.vmem [#allocation2], %s175
          %s177 = sadd.s32 %s29, %s30
          %p178 = scmp.lt.s32.totalorder %s177, 0
          %s179 = scalar_select %p178, %s177, 0
          %s180 = smul.u32 2, %s179
          %s182 = ssub.s32 256, 256
          %183 = vsyncadd %s173, %s182
          %s184 = smul.addr %s180, 128
          %s185 = scalar_lea.hbm %s0, %s184
          %s186 = sshll.u32 %s176, 4
          %s187 = int_to_ptr.vmem [resolvable:$true] %s186
          %192 = dma.hbm_to_vmem [thread:$0]  %s185, 256, %s187, %s173, 128, 128, 8
        $region20: #{tpu_custom_call.1} parent=15 // pred_fallthru
          _
        // Predicated region
        $region21: #{tpu_custom_call.1} parent=15 // pred_check
          %p193 = pneg %p92
        $region22: #{tpu_custom_call.1} parent=15 // pred_check_branch
          %195 = sbr.rel (%p193) target = $region24
        $region23: #{tpu_custom_call.1} parent=15 // pred_region
          %s196 = sand.u32 %s82, 1
          %s197 = scalar_lea.sflag [#allocation6], %s196
          %s198 = sand.u32 %s82, 1
          %s199 = smul.addr %s198, 16
          %s200 = scalar_lea.vmem [#allocation5], %s199
          %s201 = sadd.s32 %s29, %s30
          %p202 = scmp.lt.s32.totalorder %s201, 0
          %s203 = scalar_select %p202, %s201, 0
          %s204 = smul.u32 2, %s203
          %s206 = ssub.s32 256, 256
          %207 = vsyncadd %s197, %s206
          %s208 = smul.addr %s204, 128
          %s209 = scalar_lea.hbm %s1, %s208
          %s210 = sshll.u32 %s200, 4
          %s211 = int_to_ptr.vmem [resolvable:$true] %s210
          %216 = dma.hbm_to_vmem [thread:$0]  %s209, 256, %s211, %s197, 128, 128, 8
        $region24: #{tpu_custom_call.1} parent=15 // pred_fallthru
          _
      $region16: #{tpu_custom_call.1} parent=5 // pred_fallthru
        _
      %p217 = scmp.le.s32.totalorder 1, %s22
      %p218 = scmp.lt.s32.totalorder %s22, 3
      %p219 = pnand %p217, %p218
      %p220 = pneg %p219
      // Predicated region
      $region25: #{tpu_custom_call.1} parent=5 // pred_check
        _
      $region26: #{tpu_custom_call.1} parent=5 // pred_check_branch
        %222 = sbr.rel (%p219) target = $region28
      $region27: #{tpu_custom_call.1} parent=5 // pred_region
        %s223 = ssub.s32 %s22, 1
        %s224 = sand.u32 %s53, 1
        %s225 = scalar_lea.sflag [#allocation3], %s224
        %s226 = sand.u32 %s53, 1
        %s227 = smul.addr %s226, 16
        %s228 = scalar_lea.vmem [#allocation2], %s227
        // Predicated region
        $region29: #{tpu_custom_call.1} parent=27 // pred_check
          %p229 = pneg %p66
        $region30: #{tpu_custom_call.1} parent=27 // pred_check_branch
          %231 = sbr.rel (%p229) target = $region32
        $region31: #{tpu_custom_call.1} parent=27 // pred_region
          %232 = dma.done %s225, 256
        $region32: #{tpu_custom_call.1} parent=27 // pred_fallthru
          _
        %s233 = sand.u32 %s85, 1
        %s234 = scalar_lea.sflag [#allocation6], %s233
        %s235 = sand.u32 %s85, 1
        %s236 = smul.addr %s235, 16
        %s237 = scalar_lea.vmem [#allocation5], %s236
        // Predicated region
        $region33: #{tpu_custom_call.1} parent=27 // pred_check
          %p238 = pneg %p98
        $region34: #{tpu_custom_call.1} parent=27 // pred_check_branch
          %240 = sbr.rel (%p238) target = $region36
        $region35: #{tpu_custom_call.1} parent=27 // pred_region
          %241 = dma.done %s234, 256
        $region36: #{tpu_custom_call.1} parent=27 // pred_fallthru
          _
        %s242 = sand.u32 %s53, 1
        %s243 = scalar_lea.sflag [#allocation3], %s242
        %s244 = sand.u32 %s53, 1
        %s245 = smul.addr %s244, 16
        %s246 = scalar_lea.vmem [#allocation2], %s245
        %p247 = pneg %p66
        %p248 = pneg %p63
        %s249 = sand.u32 %s85, 1
        %s250 = scalar_lea.sflag [#allocation6], %s249
        %s251 = sand.u32 %s85, 1
        %s252 = smul.addr %s251, 16
        %s253 = scalar_lea.vmem [#allocation5], %s252
        %p254 = pneg %p98
        %p255 = pneg %p95
        %p256 = pneg %p124
        %p257 = pneg %p121
        %s258 = sand.u32 %s111, 1
        %s259 = scalar_lea.sflag [#allocation4], %s258
        %s260 = sand.u32 %s111, 1
        %s261 = smul.addr %s260, 8
        %s262 = scalar_lea.vmem [#allocation7], %s261
        %p263 = pneg %p150
        %p264 = pneg %p147
        %s265 = sand.u32 %s137, 1
        %s266 = scalar_lea.sflag [#allocation9], %s265
        %s267 = sand.u32 %s137, 1
        %s268 = smul.addr %s267, 8
        %s269 = scalar_lea.vmem [#allocation8], %s268
        %s270 = sadd.s32 %s31, %s32
        %p271 = scmp.lt.s32.totalorder %s270, 0
        %s272 = scalar_select %p271, %s270, 0
        %s273 = smul.u32 2, %s272
        %s274 = sadd.s32 %s31, %s32
        %p275 = scmp.lt.s32.totalorder %s274, 0
        %s276 = scalar_select %p275, %s274, 0
        %s277 = smul.u32 2, %s276
        %p278 = scmp.eq.s32.totalorder %s32, 0
        // Predicated region
        $region37: #{tpu_custom_call.1} parent=27 // pred_check
          %p279 = pneg %p278
        $region38: #{tpu_custom_call.1} parent=27 // pred_check_branch
          %281 = sbr.rel (%p279) target = $region40
        $region39: #{tpu_custom_call.1} parent=27 // pred_region
          %282 = vst [vmem:[%s262] sm:$0xff] 0.0
          %283 = vst [vmem:[%s269] sm:$0xff] 0.0
        $region40: #{tpu_custom_call.1} parent=27 // pred_fallthru
          _
        %s284 = sadd.s32 %s31, %s32
        %p285 = scmp.lt.s32.totalorder %s284, 1
        // Predicated region
        $region41: #{tpu_custom_call.1} parent=27 // pred_check
          %p286 = pneg %p285
        $region42: #{tpu_custom_call.1} parent=27 // pred_check_branch
          %288 = sbr.rel (%p286) target = $region44
        $region43: #{tpu_custom_call.1} parent=27 // pred_region
          %v289 = vld [vmem:[%s228] sm:$0xff]
          %v290 = vld [vmem:[%s228 + $0x8] sm:$0xff]
          %v291 = vld [vmem:[%s237] sm:$0xff]
          %v292 = vld [vmem:[%s237 + $0x8] sm:$0xff]
          %vm293 = vcmp.eq.f32.partialorder %v291, 1.0
          %vm294 = vcmp.eq.f32.partialorder %v292, 1.0
          %vm295 = vcmp.lt.f32.partialorder %v291, 1.0
          %vm296 = vcmp.lt.f32.partialorder %v292, 1.0
          %v297 = vlog2.pop %v289
          %v298 = vmul.f32 %v297, 0.6931472
          %v299 = vlog2.pop %v290
          %v300 = vmul.f32 %v299, 0.6931472
          %v301 = vsub.f32 1.0, %v289
          %v302 = vsub.f32 1.0, %v290
          %v303 = vmul.f32 %v301, %v301
          %v304 = vmul.f32 %v302, %v302
          %v305 = vmul.f32 %v298, %v303
          %v306 = vmul.f32 %v300, %v304
          %v307 = vsel %vm293, %v305, 0.0
          %v308 = vsel %vm294, %v306, 0.0
          %v309 = vsub.f32 0.0, %v289
          %v310 = vsub.f32 0.0, %v290
          %v311 = vadd.f32 %v309, 1.0
          %v312 = vlog2.pop %v311
          %v313 = vmul.f32 %v312, 0.6931472
          %v314 = vmul.f32 -0.5, %v309
          %v315 = vadd.f32 %v314, 1.0
          %v316 = vmul.f32 %v315, %v309
          %v317 = vand.u32 2147483647, %v309
          %vm318 = vcmp.lt.f32.partialorder %v317, 0.0004427343
          %v319 = vsel %vm318, %v316, %v313
          %v320 = vadd.f32 %v310, 1.0
          %v321 = vlog2.pop %v320
          %v322 = vmul.f32 %v321, 0.6931472
          %v323 = vmul.f32 -0.5, %v310
          %v324 = vadd.f32 %v323, 1.0
          %v325 = vmul.f32 %v324, %v310
          %v326 = vand.u32 2147483647, %v310
          %vm327 = vcmp.lt.f32.partialorder %v326, 0.0004427343
          %v328 = vsel %vm327, %v325, %v322
          %v329 = vmul.f32 %v289, %v289
          %v330 = vmul.f32 %v290, %v290
          %v331 = vmul.f32 %v319, %v329
          %v332 = vmul.f32 %v328, %v330
          %v333 = vsub.f32 1.0, %v291
          %v334 = vsub.f32 1.0, %v292
          %v335 = vmul.f32 %v333, %v333
          %v336 = vmul.f32 %v334, %v334
          %v337 = vmul.f32 %v335, %v335
          %v338 = vmul.f32 %v336, %v336
          %v339 = vmul.f32 %v331, %v337
          %v340 = vmul.f32 %v332, %v338
          %v341 = vsel %vm295, %v339, 0.0
          %v342 = vsel %vm296, %v340, 0.0
          %v343 = vadd.f32 %v307, %v341
          %v344 = vadd.f32 %v308, %v342
          %v345 = vsel %vm293, 1, 0
          %v346 = vsel %vm294, 1, 0
          %v347 = vcvt.s32.f32 %v345
          %v348 = vcvt.s32.f32 %v346
          %v349 = vadd.f32 %v343, %v344
          %v350 = vadd.f32 %v347, %v348
          %v351 = vadd.f32 %v349, 0.0
          %v352 = vadd.f32 %v350, 0.0
          %v353 = vld [vmem:[%s262] sm:$0xff]
          %v354 = vadd.f32 %v353, %v351
          %355 = vst [vmem:[%s262] sm:$0xff] %v354
          %v356 = vld [vmem:[%s269] sm:$0xff]
          %v357 = vadd.f32 %v356, %v352
          %358 = vst [vmem:[%s269] sm:$0xff] %v357
        $region44: #{tpu_custom_call.1} parent=27 // pred_fallthru
          _
        %s359 = sand.u32 %s111, 1
        %s360 = scalar_lea.sflag [#allocation4], %s359
        %s361 = sand.u32 %s111, 1
        %s362 = smul.addr %s361, 8
        %s363 = scalar_lea.vmem [#allocation7], %s362
        %s364 = sand.u32 %s137, 1
        %s365 = scalar_lea.sflag [#allocation9], %s364
        %s366 = sand.u32 %s137, 1
        %s367 = smul.addr %s366, 8
        %s368 = scalar_lea.vmem [#allocation8], %s367
        // Predicated region
        $region45: #{tpu_custom_call.1} parent=27 // pred_check
          %p369 = pneg %p121
        $region46: #{tpu_custom_call.1} parent=27 // pred_check_branch
          %371 = sbr.rel (%p369) target = $region48
        $region47: #{tpu_custom_call.1} parent=27 // pred_region
          %s373 = ssub.s32 128, 128
          %374 = vsyncadd %s360, %s373
          %s375 = smul.addr %s31, 128
          %s376 = scalar_lea.hbm %s2, %s375
          %s378 = sshll.u32 %s363, 4
          %s379 = int_to_ptr.vmem [resolvable:$true] %s378
          %381 = dma.vmem_to_hbm [thread:$0]  %s379, 128, %s376, %s360
        $region48: #{tpu_custom_call.1} parent=27 // pred_fallthru
          _
        // Predicated region
        $region49: #{tpu_custom_call.1} parent=27 // pred_check
          %p382 = pneg %p147
        $region50: #{tpu_custom_call.1} parent=27 // pred_check_branch
          %384 = sbr.rel (%p382) target = $region52
        $region51: #{tpu_custom_call.1} parent=27 // pred_region
          %s386 = ssub.s32 128, 128
          %387 = vsyncadd %s365, %s386
          %s388 = smul.addr %s31, 128
          %s389 = scalar_lea.hbm %s3, %s388
          %s391 = sshll.u32 %s368, 4
          %s392 = int_to_ptr.vmem [resolvable:$true] %s391
          %394 = dma.vmem_to_hbm [thread:$0]  %s392, 128, %s389, %s365
        $region52: #{tpu_custom_call.1} parent=27 // pred_fallthru
          _
      $region28: #{tpu_custom_call.1} parent=5 // pred_fallthru
        _
      %p395 = scmp.le.s32.totalorder 2, %s22
      // Predicated region
      $region53: #{tpu_custom_call.1} parent=5 // pred_check
        %p396 = pneg %p395
      $region54: #{tpu_custom_call.1} parent=5 // pred_check_branch
        %398 = sbr.rel (%p396) target = $region56
      $region55: #{tpu_custom_call.1} parent=5 // pred_region
        %s399 = ssub.s32 %s22, 2
        // Predicated region
        $region57: #{tpu_custom_call.1} parent=55 // pred_check
          %p400 = pneg %p127
        $region58: #{tpu_custom_call.1} parent=55 // pred_check_branch
          %402 = sbr.rel (%p400) target = $region60
        $region59: #{tpu_custom_call.1} parent=55 // pred_region
          %s403 = sand.u32 %s112, 1
          %s404 = scalar_lea.sflag [#allocation4], %s403
          %s405 = sand.u32 %s112, 1
          %s406 = smul.addr %s405, 8
          %s407 = scalar_lea.vmem [#allocation7], %s406
          %408 = dma.done %s404, 128
        $region60: #{tpu_custom_call.1} parent=55 // pred_fallthru
          _
        // Predicated region
        $region61: #{tpu_custom_call.1} parent=55 // pred_check
          %p409 = pneg %p153
        $region62: #{tpu_custom_call.1} parent=55 // pred_check_branch
          %411 = sbr.rel (%p409) target = $region64
        $region63: #{tpu_custom_call.1} parent=55 // pred_region
          %s412 = sand.u32 %s138, 1
          %s413 = scalar_lea.sflag [#allocation9], %s412
          %s414 = sand.u32 %s138, 1
          %s415 = smul.addr %s414, 8
          %s416 = scalar_lea.vmem [#allocation8], %s415
          %417 = dma.done %s413, 128
        $region64: #{tpu_custom_call.1} parent=55 // pred_fallthru
          _
      $region56: #{tpu_custom_call.1} parent=5 // pred_fallthru
        _
    $region6: #{tpu_custom_call.1} parent=1 // loop_footer
      %s26 = sadd.s32 1, %s22
    $region7: #{tpu_custom_call.1} parent=1 // loop_footer_branch
      %21 = sbr.rel target = $region3
    $region8: #{tpu_custom_call.1} parent=1 // loop_exit
      _
    %418 = vsyncpa [#allocation3], 1
    %s419 = scalar_lea.sflag [#allocation3], 1
    %420 = vsyncpa %s419, 1
    %421 = vsyncpa [#allocation6], 1
    %s422 = scalar_lea.sflag [#allocation6], 1
    %423 = vsyncpa %s422, 1
    %424 = vsyncpa [#allocation4], 1
    %s425 = scalar_lea.sflag [#allocation4], 1
    %426 = vsyncpa %s425, 1
    %427 = vsyncpa [#allocation9], 1
    %s428 = scalar_lea.sflag [#allocation9], 1
    %429 = vsyncpa %s428, 1

</llo_original>
